<compile_context>
chip_gen: v5e
topology: v5e:2x2
jax: 0.10.0
libtpu: 0.0.40
codegen_flags: <defaults>
</compile_context>

<pallas_src>
import jax
import jax.numpy as jnp
from jax.experimental import pallas as pl
from jax.experimental.pallas import tpu as pltpu

F32 = jnp.float32
BF16 = jnp.bfloat16


def _round_up(x, m):
    return (x + m - 1) // m * m


def _vmem_specs(n):
    return [pl.BlockSpec(memory_space=pltpu.MemorySpace.VMEM) for _ in range(n)]


def _dot(a, b):
    return jnp.dot(a, b, preferred_element_type=F32)


def _sage(adj, x_src, x_dst, w_l, b_l, w_r, relu):
    """SAGEConv: mean_agg(x_src) @ W_l + b_l + x_dst @ W_r (+ ReLU).

    All operands are bf16 except the f32 bias; accumulation is f32.  The two
    matmuls are reassociated at trace time so the large (N_dst x N_src) matmul
    always contracts over min(F_src, H).
    """
    f_src, h = w_l.shape
    if f_src > h:                       # project-then-aggregate
        out = _dot(adj, _dot(x_src, w_l).astype(BF16))
    else:                               # aggregate-then-project
        out = _dot(_dot(adj, x_src).astype(BF16), w_l)
    out = out + b_l + _dot(x_dst, w_r)
    if relu:
        out = jnp.maximum(out, 0.0)
    return out


# -----------------------------------------------------------------------------
# One fused kernel: hetero encoder (both edge types, both layers) + decoder.
# -----------------------------------------------------------------------------
def fused_model_kernel(
        adj_td_ref, adj_dt_ref, x_drug_ref, x_dis_ref,
        c1_td_wl, c1_td_bl, c1_td_wr,
        c1_dt_wl, c1_dt_bl, c1_dt_wr,
        c2_td_wl, c2_td_bl, c2_td_wr,
        c2_dt_wl, c2_dt_bl, c2_dt_wr,
        sel_row_ref, sel_col_ref,
        dw1a_ref, dw1b_ref, db1_ref, dw2t_ref, db2_ref,
        out_ref):
    adj_td = adj_td_ref[...]            # (N_dis_p, N_drug_p)  bf16
    adj_dt = adj_dt_ref[...]            # (N_drug_p, N_dis_p)  bf16
    x_drug = x_drug_ref[...]            # (N_drug_p, F_drug)   bf16
    x_dis = x_dis_ref[...]              # (N_dis_p, F_dis)     bf16

    # ---- encoder layer 1 (SAGEConv + ReLU) -----------------------------------
    h_dis = _sage(adj_td, x_drug, x_dis,
                  c1_td_wl[...], c1_td_bl[...], c1_td_wr[...], relu=True)
    h_drug = _sage(adj_dt, x_dis, x_drug,
                   c1_dt_wl[...], c1_dt_bl[...], c1_dt_wr[...], relu=True)
    h_dis_b = h_dis.astype(BF16)
    h_drug_b = h_drug.astype(BF16)

    # ---- encoder layer 2 (SAGEConv, no activation) ---------------------------
    z_dis = _sage(adj_td, h_drug_b, h_dis_b,
                  c2_td_wl[...], c2_td_bl[...], c2_td_wr[...],
                  relu=False).astype(BF16)
    z_drug = _sage(adj_dt, h_dis_b, h_drug_b,
                   c2_dt_wl[...], c2_dt_bl[...], c2_dt_wr[...],
                   relu=False).astype(BF16)

    # ---- decoder --------------------------------------------------------------
    # gather-by-matmul (one-hot selection) replaces z_dict[...][row] gathers;
    # the concat is fused as two matmuls against the split halves of W1.
    z_row = _dot(sel_row_ref[...], z_drug).astype(BF16)    # (E_pad, H)
    z_col = _dot(sel_col_ref[...], z_dis).astype(BF16)     # (E_pad, H)
    h = _dot(z_row, dw1a_ref[...]) + _dot(z_col, dw1b_ref[...]) + db1_ref[...]
    h = jax.nn.sigmoid(h).astype(BF16)                     # (E_pad, H)

    # lane-dense final projection: (1,H) x (E_pad,H)^T -> (1, E_pad)
    scores = jax.lax.dot_general(
        dw2t_ref[...], h,
        dimension_numbers=(((1,), (1,)), ((), ())),
        preferred_element_type=F32)
    out_ref[...] = scores + db2_ref[...]                   # (1, E_pad) f32


# -----------------------------------------------------------------------------
# Glue: dense row-normalized adjacency for PyG mean aggregation.
# Duplicate edges are counted (multiplicity-aware), matching SAGEConv 'mean'.
# -----------------------------------------------------------------------------
def dense_mean_adj(edge_index, n_dst_pad, n_src_pad):
    src, dst = edge_index[0], edge_index[1]
    adj = jnp.zeros((n_dst_pad, n_src_pad), F32).at[dst, src].add(1.0)
    deg = adj.sum(axis=1, keepdims=True)
    return adj / jnp.maximum(deg, 1.0)


# -----------------------------------------------------------------------------
# Parameter init (deterministic).  Node types: 'Drug', 'Disease'.
# Edge types: ('Drug','treats','Disease'), ('Disease','rev_treats','Drug').
# -----------------------------------------------------------------------------
def init_params(key, f_drug, f_dis, hidden):
    ks = jax.random.split(key, 16)
    s = 0.1

    def w(k, shape):
        return jax.random.normal(k, shape, F32) * s

    return dict(
        c1_td_wl=w(ks[0], (f_drug, hidden)), c1_td_bl=w(ks[1], (hidden,)),
        c1_td_wr=w(ks[2], (f_dis, hidden)),
        c1_dt_wl=w(ks[3], (f_dis, hidden)), c1_dt_bl=w(ks[4], (hidden,)),
        c1_dt_wr=w(ks[5], (f_drug, hidden)),
        c2_td_wl=w(ks[6], (hidden, hidden)), c2_td_bl=w(ks[7], (hidden,)),
        c2_td_wr=w(ks[8], (hidden, hidden)),
        c2_dt_wl=w(ks[9], (hidden, hidden)), c2_dt_bl=w(ks[10], (hidden,)),
        c2_dt_wr=w(ks[11], (hidden, hidden)),
        dec_w1=w(ks[12], (2 * hidden, hidden)), dec_b1=w(ks[13], (hidden,)),
        dec_w2=w(ks[14], (hidden, 1)), dec_b2=w(ks[15], (1,)),
    )


def model_forward(params, x_dict, edge_index_dict, edge_label_index):
    x_drug = x_dict['Drug'].astype(F32)
    x_dis = x_dict['Disease'].astype(F32)
    n_drug, n_dis = x_drug.shape[0], x_dis.shape[0]
    n_drug_p = _round_up(n_drug, 8)
    n_dis_p = _round_up(n_dis, 8)

    # normalized adjacencies (Disease <- Drug and Drug <- Disease)
    ei_td = edge_index_dict[('Drug', 'treats', 'Disease')]
    ei_dt = edge_index_dict[('Disease', 'rev_treats', 'Drug')]
    adj_td = dense_mean_adj(ei_td, n_dis_p, n_drug_p)
    adj_dt = dense_mean_adj(ei_dt, n_drug_p, n_dis_p)

    # zero-pad node features to sublane multiples (padded rows never selected)
    x_drug_p = jnp.zeros((n_drug_p, x_drug.shape[1]), F32).at[:n_drug].set(x_drug)
    x_dis_p = jnp.zeros((n_dis_p, x_dis.shape[1]), F32).at[:n_dis].set(x_dis)

    # one-hot selection matrices for the edge-endpoint gathers (lane-padded E)
    row, col = edge_label_index[0], edge_label_index[1]
    e = row.shape[0]
    e_pad = max(_round_up(e, 128), 128)
    sel_row = jnp.zeros((e_pad, n_drug_p), F32).at[jnp.arange(e), row].set(1.0)
    sel_col = jnp.zeros((e_pad, n_dis_p), F32).at[jnp.arange(e), col].set(1.0)

    p = params
    hidden = p['dec_b1'].shape[0]

    def wb(name):
        return p[name].astype(BF16)

    def bias(name):
        return p[name].reshape(1, -1).astype(F32)

    args = (
        adj_td.astype(BF16), adj_dt.astype(BF16),
        x_drug_p.astype(BF16), x_dis_p.astype(BF16),
        wb('c1_td_wl'), bias('c1_td_bl'), wb('c1_td_wr'),
        wb('c1_dt_wl'), bias('c1_dt_bl'), wb('c1_dt_wr'),
        wb('c2_td_wl'), bias('c2_td_bl'), wb('c2_td_wr'),
        wb('c2_dt_wl'), bias('c2_dt_bl'), wb('c2_dt_wr'),
        sel_row.astype(BF16), sel_col.astype(BF16),
        p['dec_w1'][:hidden].astype(BF16),        # W1, z_drug half  (H, H)
        p['dec_w1'][hidden:].astype(BF16),        # W1, z_dis  half  (H, H)
        bias('dec_b1'),                           # (1, H) f32
        p['dec_w2'].reshape(1, -1).astype(BF16),  # (1, H) bf16
        p['dec_b2'].reshape(1, 1).astype(F32),    # (1, 1) f32
    )

    out = pl.pallas_call(
        fused_model_kernel,
        out_shape=jax.ShapeDtypeStruct((1, e_pad), F32),
        in_specs=_vmem_specs(len(args)),
        out_specs=pl.BlockSpec(memory_space=pltpu.MemorySpace.VMEM),
        compiler_params=pltpu.CompilerParams(
            vmem_limit_bytes=32 * 1024 * 1024),
    )(*args)
    return out[0, :e]


if __name__ == "__main__":
    HIDDEN = 32
    N_DRUG, N_DIS = 8, 10
    F_DRUG, F_DIS = 16, 12
    E_TREAT, E_LABEL = 24, 12

    key = jax.random.PRNGKey(0)
    k_feat_d, k_feat_s, k_edge_s, k_edge_d, k_lbl_s, k_lbl_d, k_par = (
        jax.random.split(key, 7))

    x_dict = {
        'Drug': jax.random.normal(k_feat_d, (N_DRUG, F_DRUG), F32),
        'Disease': jax.random.normal(k_feat_s, (N_DIS, F_DIS), F32),
    }

    # ('Drug','treats','Disease') edges and their ToUndirected() reverse.
    treat_src = jax.random.randint(k_edge_s, (E_TREAT,), 0, N_DRUG)
    treat_dst = jax.random.randint(k_edge_d, (E_TREAT,), 0, N_DIS)
    edge_index_dict = {
        ('Drug', 'treats', 'Disease'): jnp.stack([treat_src, treat_dst]),
        ('Disease', 'rev_treats', 'Drug'): jnp.stack([treat_dst, treat_src]),
    }

    edge_label_index = jnp.stack([
        jax.random.randint(k_lbl_s, (E_LABEL,), 0, N_DRUG),
        jax.random.randint(k_lbl_d, (E_LABEL,), 0, N_DIS),
    ])

    params = init_params(k_par, F_DRUG, F_DIS, HIDDEN)

    out = jax.jit(model_forward)(params, x_dict, edge_index_dict,
                                 edge_label_index)
    jax.block_until_ready(out)
    assert out.shape == (E_LABEL,) and out.dtype == jnp.float32
    print("KERNEL_OK")
</pallas_src>

<mosaic_0001>
module attributes {stable_mosaic.version = 11 : i64} {
  func.func @fused_model_kernel(%arg0: memref<16x8xbf16, #tpu.memory_space<vmem>>, %arg1: memref<8x16xbf16, #tpu.memory_space<vmem>>, %arg2: memref<8x16xbf16, #tpu.memory_space<vmem>>, %arg3: memref<16x12xbf16, #tpu.memory_space<vmem>>, %arg4: memref<16x32xbf16, #tpu.memory_space<vmem>>, %arg5: memref<1x32xf32, #tpu.memory_space<vmem>>, %arg6: memref<12x32xbf16, #tpu.memory_space<vmem>>, %arg7: memref<12x32xbf16, #tpu.memory_space<vmem>>, %arg8: memref<1x32xf32, #tpu.memory_space<vmem>>, %arg9: memref<16x32xbf16, #tpu.memory_space<vmem>>, %arg10: memref<32x32xbf16, #tpu.memory_space<vmem>>, %arg11: memref<1x32xf32, #tpu.memory_space<vmem>>, %arg12: memref<32x32xbf16, #tpu.memory_space<vmem>>, %arg13: memref<32x32xbf16, #tpu.memory_space<vmem>>, %arg14: memref<1x32xf32, #tpu.memory_space<vmem>>, %arg15: memref<32x32xbf16, #tpu.memory_space<vmem>>, %arg16: memref<128x8xbf16, #tpu.memory_space<vmem>>, %arg17: memref<128x16xbf16, #tpu.memory_space<vmem>>, %arg18: memref<32x32xbf16, #tpu.memory_space<vmem>>, %arg19: memref<32x32xbf16, #tpu.memory_space<vmem>>, %arg20: memref<1x32xf32, #tpu.memory_space<vmem>>, %arg21: memref<1x32xbf16, #tpu.memory_space<vmem>>, %arg22: memref<1x1xf32, #tpu.memory_space<vmem>>, %arg23: memref<1x128xf32, #tpu.memory_space<vmem>>) attributes {dimension_semantics = [], scalar_prefetch = 0 : i64, scratch_operands = 0 : i64, tpu.core_type = #tpu.core_type<tc>} {
    %c0 = arith.constant 0 : index
    %c0_0 = arith.constant 0 : index
    %0 = vector.load %arg0[%c0, %c0_0] : memref<16x8xbf16, #tpu.memory_space<vmem>>, vector<16x8xbf16>
    %c0_1 = arith.constant 0 : index
    %c0_2 = arith.constant 0 : index
    %1 = vector.load %arg1[%c0_1, %c0_2] : memref<8x16xbf16, #tpu.memory_space<vmem>>, vector<8x16xbf16>
    %c0_3 = arith.constant 0 : index
    %c0_4 = arith.constant 0 : index
    %2 = vector.load %arg2[%c0_3, %c0_4] : memref<8x16xbf16, #tpu.memory_space<vmem>>, vector<8x16xbf16>
    %c0_5 = arith.constant 0 : index
    %c0_6 = arith.constant 0 : index
    %3 = vector.load %arg3[%c0_5, %c0_6] : memref<16x12xbf16, #tpu.memory_space<vmem>>, vector<16x12xbf16>
    %c0_7 = arith.constant 0 : index
    %c0_8 = arith.constant 0 : index
    %4 = vector.load %arg4[%c0_7, %c0_8] : memref<16x32xbf16, #tpu.memory_space<vmem>>, vector<16x32xbf16>
    %c0_9 = arith.constant 0 : index
    %c0_10 = arith.constant 0 : index
    %5 = vector.load %arg5[%c0_9, %c0_10] : memref<1x32xf32, #tpu.memory_space<vmem>>, vector<1x32xf32>
    %c0_11 = arith.constant 0 : index
    %c0_12 = arith.constant 0 : index
    %6 = vector.load %arg6[%c0_11, %c0_12] : memref<12x32xbf16, #tpu.memory_space<vmem>>, vector<12x32xbf16>
    %cst = arith.constant dense<0.000000e+00> : vector<16x16xf32>
    %7 = tpu.matmul %0, %2, %cst {dimension_numbers = #tpu.dot_dimension_numbers<[1], [0], [0], [1], [0, 0, 1, 1], [], []>} : vector<16x8xbf16>, vector<8x16xbf16>, vector<16x16xf32> -> vector<16x16xf32>
    %8 = arith.truncf %7 : vector<16x16xf32> to vector<16x16xbf16>
    %cst_13 = arith.constant dense<0.000000e+00> : vector<16x32xf32>
    %9 = tpu.matmul %8, %4, %cst_13 {dimension_numbers = #tpu.dot_dimension_numbers<[1], [0], [0], [1], [0, 0, 1, 1], [], []>} : vector<16x16xbf16>, vector<16x32xbf16>, vector<16x32xf32> -> vector<16x32xf32>
    %10 = vector.broadcast %5 : vector<1x32xf32> to vector<16x32xf32>
    %11 = arith.addf %9, %10 : vector<16x32xf32>
    %cst_14 = arith.constant dense<0.000000e+00> : vector<16x32xf32>
    %12 = tpu.matmul %3, %6, %cst_14 {dimension_numbers = #tpu.dot_dimension_numbers<[1], [0], [0], [1], [0, 0, 1, 1], [], []>} : vector<16x12xbf16>, vector<12x32xbf16>, vector<16x32xf32> -> vector<16x32xf32>
    %13 = arith.addf %11, %12 : vector<16x32xf32>
    %cst_15 = arith.constant 0.000000e+00 : f32
    %14 = vector.broadcast %cst_15 : f32 to vector<16x32xf32>
    %15 = arith.maximumf %13, %14 : vector<16x32xf32>
    %c0_16 = arith.constant 0 : index
    %c0_17 = arith.constant 0 : index
    %16 = vector.load %arg7[%c0_16, %c0_17] : memref<12x32xbf16, #tpu.memory_space<vmem>>, vector<12x32xbf16>
    %c0_18 = arith.constant 0 : index
    %c0_19 = arith.constant 0 : index
    %17 = vector.load %arg8[%c0_18, %c0_19] : memref<1x32xf32, #tpu.memory_space<vmem>>, vector<1x32xf32>
    %c0_20 = arith.constant 0 : index
    %c0_21 = arith.constant 0 : index
    %18 = vector.load %arg9[%c0_20, %c0_21] : memref<16x32xbf16, #tpu.memory_space<vmem>>, vector<16x32xbf16>
    %cst_22 = arith.constant dense<0.000000e+00> : vector<8x12xf32>
    %19 = tpu.matmul %1, %3, %cst_22 {dimension_numbers = #tpu.dot_dimension_numbers<[1], [0], [0], [1], [0, 0, 1, 1], [], []>} : vector<8x16xbf16>, vector<16x12xbf16>, vector<8x12xf32> -> vector<8x12xf32>
    %20 = arith.truncf %19 : vector<8x12xf32> to vector<8x12xbf16>
    %cst_23 = arith.constant dense<0.000000e+00> : vector<8x32xf32>
    %21 = tpu.matmul %20, %16, %cst_23 {dimension_numbers = #tpu.dot_dimension_numbers<[1], [0], [0], [1], [0, 0, 1, 1], [], []>} : vector<8x12xbf16>, vector<12x32xbf16>, vector<8x32xf32> -> vector<8x32xf32>
    %22 = vector.broadcast %17 : vector<1x32xf32> to vector<8x32xf32>
    %23 = arith.addf %21, %22 : vector<8x32xf32>
    %cst_24 = arith.constant dense<0.000000e+00> : vector<8x32xf32>
    %24 = tpu.matmul %2, %18, %cst_24 {dimension_numbers = #tpu.dot_dimension_numbers<[1], [0], [0], [1], [0, 0, 1, 1], [], []>} : vector<8x16xbf16>, vector<16x32xbf16>, vector<8x32xf32> -> vector<8x32xf32>
    %25 = arith.addf %23, %24 : vector<8x32xf32>
    %cst_25 = arith.constant 0.000000e+00 : f32
    %26 = vector.broadcast %cst_25 : f32 to vector<8x32xf32>
    %27 = arith.maximumf %25, %26 : vector<8x32xf32>
    %28 = arith.truncf %15 : vector<16x32xf32> to vector<16x32xbf16>
    %29 = arith.truncf %27 : vector<8x32xf32> to vector<8x32xbf16>
    %c0_26 = arith.constant 0 : index
    %c0_27 = arith.constant 0 : index
    %30 = vector.load %arg10[%c0_26, %c0_27] : memref<32x32xbf16, #tpu.memory_space<vmem>>, vector<32x32xbf16>
    %c0_28 = arith.constant 0 : index
    %c0_29 = arith.constant 0 : index
    %31 = vector.load %arg11[%c0_28, %c0_29] : memref<1x32xf32, #tpu.memory_space<vmem>>, vector<1x32xf32>
    %c0_30 = arith.constant 0 : index
    %c0_31 = arith.constant 0 : index
    %32 = vector.load %arg12[%c0_30, %c0_31] : memref<32x32xbf16, #tpu.memory_space<vmem>>, vector<32x32xbf16>
    %cst_32 = arith.constant dense<0.000000e+00> : vector<16x32xf32>
    %33 = tpu.matmul %0, %29, %cst_32 {dimension_numbers = #tpu.dot_dimension_numbers<[1], [0], [0], [1], [0, 0, 1, 1], [], []>} : vector<16x8xbf16>, vector<8x32xbf16>, vector<16x32xf32> -> vector<16x32xf32>
    %34 = arith.truncf %33 : vector<16x32xf32> to vector<16x32xbf16>
    %cst_33 = arith.constant dense<0.000000e+00> : vector<16x32xf32>
    %35 = tpu.matmul %34, %30, %cst_33 {dimension_numbers = #tpu.dot_dimension_numbers<[1], [0], [0], [1], [0, 0, 1, 1], [], []>} : vector<16x32xbf16>, vector<32x32xbf16>, vector<16x32xf32> -> vector<16x32xf32>
    %36 = vector.broadcast %31 : vector<1x32xf32> to vector<16x32xf32>
    %37 = arith.addf %35, %36 : vector<16x32xf32>
    %cst_34 = arith.constant dense<0.000000e+00> : vector<16x32xf32>
    %38 = tpu.matmul %28, %32, %cst_34 {dimension_numbers = #tpu.dot_dimension_numbers<[1], [0], [0], [1], [0, 0, 1, 1], [], []>} : vector<16x32xbf16>, vector<32x32xbf16>, vector<16x32xf32> -> vector<16x32xf32>
    %39 = arith.addf %37, %38 : vector<16x32xf32>
    %40 = arith.truncf %39 : vector<16x32xf32> to vector<16x32xbf16>
    %c0_35 = arith.constant 0 : index
    %c0_36 = arith.constant 0 : index
    %41 = vector.load %arg13[%c0_35, %c0_36] : memref<32x32xbf16, #tpu.memory_space<vmem>>, vector<32x32xbf16>
    %c0_37 = arith.constant 0 : index
    %c0_38 = arith.constant 0 : index
    %42 = vector.load %arg14[%c0_37, %c0_38] : memref<1x32xf32, #tpu.memory_space<vmem>>, vector<1x32xf32>
    %c0_39 = arith.constant 0 : index
    %c0_40 = arith.constant 0 : index
    %43 = vector.load %arg15[%c0_39, %c0_40] : memref<32x32xbf16, #tpu.memory_space<vmem>>, vector<32x32xbf16>
    %cst_41 = arith.constant dense<0.000000e+00> : vector<8x32xf32>
    %44 = tpu.matmul %1, %28, %cst_41 {dimension_numbers = #tpu.dot_dimension_numbers<[1], [0], [0], [1], [0, 0, 1, 1], [], []>} : vector<8x16xbf16>, vector<16x32xbf16>, vector<8x32xf32> -> vector<8x32xf32>
    %45 = arith.truncf %44 : vector<8x32xf32> to vector<8x32xbf16>
    %cst_42 = arith.constant dense<0.000000e+00> : vector<8x32xf32>
    %46 = tpu.matmul %45, %41, %cst_42 {dimension_numbers = #tpu.dot_dimension_numbers<[1], [0], [0], [1], [0, 0, 1, 1], [], []>} : vector<8x32xbf16>, vector<32x32xbf16>, vector<8x32xf32> -> vector<8x32xf32>
    %47 = vector.broadcast %42 : vector<1x32xf32> to vector<8x32xf32>
    %48 = arith.addf %46, %47 : vector<8x32xf32>
    %cst_43 = arith.constant dense<0.000000e+00> : vector<8x32xf32>
    %49 = tpu.matmul %29, %43, %cst_43 {dimension_numbers = #tpu.dot_dimension_numbers<[1], [0], [0], [1], [0, 0, 1, 1], [], []>} : vector<8x32xbf16>, vector<32x32xbf16>, vector<8x32xf32> -> vector<8x32xf32>
    %50 = arith.addf %48, %49 : vector<8x32xf32>
    %51 = arith.truncf %50 : vector<8x32xf32> to vector<8x32xbf16>
    %c0_44 = arith.constant 0 : index
    %c0_45 = arith.constant 0 : index
    %52 = vector.load %arg16[%c0_44, %c0_45] : memref<128x8xbf16, #tpu.memory_space<vmem>>, vector<128x8xbf16>
    %cst_46 = arith.constant dense<0.000000e+00> : vector<128x32xf32>
    %53 = tpu.matmul %52, %51, %cst_46 {dimension_numbers = #tpu.dot_dimension_numbers<[1], [0], [0], [1], [0, 0, 1, 1], [], []>} : vector<128x8xbf16>, vector<8x32xbf16>, vector<128x32xf32> -> vector<128x32xf32>
    %54 = arith.truncf %53 : vector<128x32xf32> to vector<128x32xbf16>
    %c0_47 = arith.constant 0 : index
    %c0_48 = arith.constant 0 : index
    %55 = vector.load %arg17[%c0_47, %c0_48] : memref<128x16xbf16, #tpu.memory_space<vmem>>, vector<128x16xbf16>
    %cst_49 = arith.constant dense<0.000000e+00> : vector<128x32xf32>
    %56 = tpu.matmul %55, %40, %cst_49 {dimension_numbers = #tpu.dot_dimension_numbers<[1], [0], [0], [1], [0, 0, 1, 1], [], []>} : vector<128x16xbf16>, vector<16x32xbf16>, vector<128x32xf32> -> vector<128x32xf32>
    %57 = arith.truncf %56 : vector<128x32xf32> to vector<128x32xbf16>
    %c0_50 = arith.constant 0 : index
    %c0_51 = arith.constant 0 : index
    %58 = vector.load %arg18[%c0_50, %c0_51] : memref<32x32xbf16, #tpu.memory_space<vmem>>, vector<32x32xbf16>
    %cst_52 = arith.constant dense<0.000000e+00> : vector<128x32xf32>
    %59 = tpu.matmul %54, %58, %cst_52 {dimension_numbers = #tpu.dot_dimension_numbers<[1], [0], [0], [1], [0, 0, 1, 1], [], []>} : vector<128x32xbf16>, vector<32x32xbf16>, vector<128x32xf32> -> vector<128x32xf32>
    %c0_53 = arith.constant 0 : index
    %c0_54 = arith.constant 0 : index
    %60 = vector.load %arg19[%c0_53, %c0_54] : memref<32x32xbf16, #tpu.memory_space<vmem>>, vector<32x32xbf16>
    %cst_55 = arith.constant dense<0.000000e+00> : vector<128x32xf32>
    %61 = tpu.matmul %57, %60, %cst_55 {dimension_numbers = #tpu.dot_dimension_numbers<[1], [0], [0], [1], [0, 0, 1, 1], [], []>} : vector<128x32xbf16>, vector<32x32xbf16>, vector<128x32xf32> -> vector<128x32xf32>
    %62 = arith.addf %59, %61 : vector<128x32xf32>
    %c0_56 = arith.constant 0 : index
    %c0_57 = arith.constant 0 : index
    %63 = vector.load %arg20[%c0_56, %c0_57] : memref<1x32xf32, #tpu.memory_space<vmem>>, vector<1x32xf32>
    %64 = vector.broadcast %63 : vector<1x32xf32> to vector<128x32xf32>
    %65 = arith.addf %62, %64 : vector<128x32xf32>
    %66 = arith.negf %65 : vector<128x32xf32>
    %67 = math.exp %66 : vector<128x32xf32>
    %cst_58 = arith.constant 1.000000e+00 : f32
    %68 = vector.broadcast %cst_58 : f32 to vector<128x32xf32>
    %69 = arith.addf %68, %67 : vector<128x32xf32>
    %70 = arith.divf %68, %69 : vector<128x32xf32>
    %71 = arith.truncf %70 : vector<128x32xf32> to vector<128x32xbf16>
    %c0_59 = arith.constant 0 : index
    %c0_60 = arith.constant 0 : index
    %72 = vector.load %arg21[%c0_59, %c0_60] : memref<1x32xbf16, #tpu.memory_space<vmem>>, vector<1x32xbf16>
    %cst_61 = arith.constant dense<0.000000e+00> : vector<1x128xf32>
    %73 = tpu.matmul %72, %71, %cst_61 {dimension_numbers = #tpu.dot_dimension_numbers<[1], [1], [0], [0], [0, 0, 1, 0], [], []>} : vector<1x32xbf16>, vector<128x32xbf16>, vector<1x128xf32> -> vector<1x128xf32>
    %c0_62 = arith.constant 0 : index
    %c0_63 = arith.constant 0 : index
    %74 = vector.load %arg22[%c0_62, %c0_63] : memref<1x1xf32, #tpu.memory_space<vmem>>, vector<1x1xf32>
    %75 = vector.broadcast %74 : vector<1x1xf32> to vector<1x128xf32>
    %76 = arith.addf %73, %75 : vector<1x128xf32>
    %c0_64 = arith.constant 0 : index
    %c0_65 = arith.constant 0 : index
    %77 = vector.load %arg23[%c0_64, %c0_65] : memref<1x128xf32, #tpu.memory_space<vmem>>, vector<1x128xf32>
    tpu.vector_store %arg23[%c0_64, %c0_65], %76 {strides = array<i32>} : memref<1x128xf32, #tpu.memory_space<vmem>>, vector<1x128xf32>,
    return
  }
}

</mosaic_0001>

<llo_original>
// kernel: model_forward.1
$region0: #{model_forward.1}
  #allocation0 [shape = 'u32[]', space=smem, size = 0x4, offset = 0x4, fixed_abs, tag = 'smem constant byte address 0x4 - core index']
  #allocation1 [shape = 'u32[72,128]{1,0:T(1,128)}', space=vmem, size = 0x9000, scoped, tag = 'internal scratch']
  #allocation2 [shape = 'f32[1,1]{1,0:T(1,128)S(1)}', space=vmem, size = 0x200, scoped, tag = 'scoped memory for model_forward.1']
  %s0 = inlined_call_operand.vmem [shape: bf16[16,8], index: 0, kind: input, shape index: {}]
  %s1 = inlined_call_operand.vmem [shape: bf16[8,16], index: 1, kind: input, shape index: {}]
  %s2 = inlined_call_operand.vmem [shape: bf16[8,16], index: 2, kind: input, shape index: {}]
  %s3 = inlined_call_operand.vmem [shape: bf16[16,12], index: 3, kind: input, shape index: {}]
  %s4 = inlined_call_operand.vmem [shape: bf16[16,32], index: 4, kind: input, shape index: {}]
  %s5 = inlined_call_operand.vmem [shape: f32[1,32], index: 5, kind: input, shape index: {}]
  %s6 = inlined_call_operand.vmem [shape: bf16[12,32], index: 6, kind: input, shape index: {}]
  %s7 = inlined_call_operand.vmem [shape: bf16[12,32], index: 7, kind: input, shape index: {}]
  %s8 = inlined_call_operand.vmem [shape: f32[1,32], index: 8, kind: input, shape index: {}]
  %s9 = inlined_call_operand.vmem [shape: bf16[16,32], index: 9, kind: input, shape index: {}]
  %s10 = inlined_call_operand.vmem [shape: bf16[32,32], index: 10, kind: input, shape index: {}]
  %s11 = inlined_call_operand.vmem [shape: f32[1,32], index: 11, kind: input, shape index: {}]
  %s12 = inlined_call_operand.vmem [shape: bf16[32,32], index: 12, kind: input, shape index: {}]
  %s13 = inlined_call_operand.vmem [shape: bf16[32,32], index: 13, kind: input, shape index: {}]
  %s14 = inlined_call_operand.vmem [shape: f32[1,32], index: 14, kind: input, shape index: {}]
  %s15 = inlined_call_operand.vmem [shape: bf16[32,32], index: 15, kind: input, shape index: {}]
  %s16 = inlined_call_operand.vmem [shape: bf16[128,8], index: 16, kind: input, shape index: {}]
  %s17 = inlined_call_operand.vmem [shape: bf16[128,16], index: 17, kind: input, shape index: {}]
  %s18 = inlined_call_operand.vmem [shape: bf16[32,32], index: 18, kind: input, shape index: {}]
  %s19 = inlined_call_operand.vmem [shape: bf16[32,32], index: 19, kind: input, shape index: {}]
  %s20 = inlined_call_operand.vmem [shape: f32[1,32], index: 20, kind: input, shape index: {}]
  %s21 = inlined_call_operand.vmem [shape: bf16[1,32], index: 21, kind: input, shape index: {}]
  %s22 = inlined_call_operand.<no memory space> [shape: f32[1,1], index: 22, kind: input, shape index: {}]
  %s23 = inlined_call_operand.vmem [shape: f32[1,128], index: 23, kind: output, shape index: {}]
  %s24 = sld [smem:[#allocation0]]
  $region102: #{model_forward.1} parent=0
    _
  %s26 = ssub.s32 1, %s24
  %s27 = scalar_select 0, %s26, %s24
  %v28 = vstv %s22
  %29 = vst [vmem:[#allocation2] sm:$0x1] %v28
  // Predicated region
  $region2: #{model_forward.1} parent=0 // pred_check
    _
  $region3: #{model_forward.1} parent=0 // pred_check_branch
    %31 = sbr.rel (0) target = $region5
  $region4: #{model_forward.1} parent=0 // pred_region
    _
  $region5: #{model_forward.1} parent=0 // pred_fallthru
    _
  // Predicated region
  $region6: #{model_forward.1} parent=0 // pred_check
    _
  $region7: #{model_forward.1} parent=0 // pred_check_branch
    %33 = sbr.rel (0) target = $region9
  $region8: #{model_forward.1} parent=0 // pred_region
    _
  $region9: #{model_forward.1} parent=0 // pred_fallthru
    _
  // Predicated region
  $region10: #{model_forward.1} parent=0 // pred_check
    _
  $region11: #{model_forward.1} parent=0 // pred_check_branch
    %35 = sbr.rel (0) target = $region13
  $region12: #{model_forward.1} parent=0 // pred_region
    _
  $region13: #{model_forward.1} parent=0 // pred_fallthru
    _
  // Predicated region
  $region14: #{model_forward.1} parent=0 // pred_check
    _
  $region15: #{model_forward.1} parent=0 // pred_check_branch
    %37 = sbr.rel (0) target = $region17
  $region16: #{model_forward.1} parent=0 // pred_region
    _
  $region17: #{model_forward.1} parent=0 // pred_fallthru
    _
  // Predicated region
  $region18: #{model_forward.1} parent=0 // pred_check
    _
  $region19: #{model_forward.1} parent=0 // pred_check_branch
    %39 = sbr.rel (0) target = $region21
  $region20: #{model_forward.1} parent=0 // pred_region
    _
  $region21: #{model_forward.1} parent=0 // pred_fallthru
    _
  // Predicated region
  $region22: #{model_forward.1} parent=0 // pred_check
    _
  $region23: #{model_forward.1} parent=0 // pred_check_branch
    %41 = sbr.rel (0) target = $region25
  $region24: #{model_forward.1} parent=0 // pred_region
    _
  $region25: #{model_forward.1} parent=0 // pred_fallthru
    _
  // Predicated region
  $region26: #{model_forward.1} parent=0 // pred_check
    _
  $region27: #{model_forward.1} parent=0 // pred_check_branch
    %43 = sbr.rel (0) target = $region29
  $region28: #{model_forward.1} parent=0 // pred_region
    _
  $region29: #{model_forward.1} parent=0 // pred_fallthru
    _
  // Predicated region
  $region30: #{model_forward.1} parent=0 // pred_check
    _
  $region31: #{model_forward.1} parent=0 // pred_check_branch
    %45 = sbr.rel (0) target = $region33
  $region32: #{model_forward.1} parent=0 // pred_region
    _
  $region33: #{model_forward.1} parent=0 // pred_fallthru
    _
  // Predicated region
  $region34: #{model_forward.1} parent=0 // pred_check
    _
  $region35: #{model_forward.1} parent=0 // pred_check_branch
    %47 = sbr.rel (0) target = $region37
  $region36: #{model_forward.1} parent=0 // pred_region
    _
  $region37: #{model_forward.1} parent=0 // pred_fallthru
    _
  // Predicated region
  $region38: #{model_forward.1} parent=0 // pred_check
    _
  $region39: #{model_forward.1} parent=0 // pred_check_branch
    %49 = sbr.rel (0) target = $region41
  $region40: #{model_forward.1} parent=0 // pred_region
    _
  $region41: #{model_forward.1} parent=0 // pred_fallthru
    _
  // Predicated region
  $region42: #{model_forward.1} parent=0 // pred_check
    _
  $region43: #{model_forward.1} parent=0 // pred_check_branch
    %51 = sbr.rel (0) target = $region45
  $region44: #{model_forward.1} parent=0 // pred_region
    _
  $region45: #{model_forward.1} parent=0 // pred_fallthru
    _
  // Predicated region
  $region46: #{model_forward.1} parent=0 // pred_check
    _
  $region47: #{model_forward.1} parent=0 // pred_check_branch
    %53 = sbr.rel (0) target = $region49
  $region48: #{model_forward.1} parent=0 // pred_region
    _
  $region49: #{model_forward.1} parent=0 // pred_fallthru
    _
  // Predicated region
  $region50: #{model_forward.1} parent=0 // pred_check
    _
  $region51: #{model_forward.1} parent=0 // pred_check_branch
    %55 = sbr.rel (0) target = $region53
  $region52: #{model_forward.1} parent=0 // pred_region
    _
  $region53: #{model_forward.1} parent=0 // pred_fallthru
    _
  // Predicated region
  $region54: #{model_forward.1} parent=0 // pred_check
    _
  $region55: #{model_forward.1} parent=0 // pred_check_branch
    %57 = sbr.rel (0) target = $region57
  $region56: #{model_forward.1} parent=0 // pred_region
    _
  $region57: #{model_forward.1} parent=0 // pred_fallthru
    _
  // Predicated region
  $region58: #{model_forward.1} parent=0 // pred_check
    _
  $region59: #{model_forward.1} parent=0 // pred_check_branch
    %59 = sbr.rel (0) target = $region61
  $region60: #{model_forward.1} parent=0 // pred_region
    _
  $region61: #{model_forward.1} parent=0 // pred_fallthru
    _
  // Predicated region
  $region62: #{model_forward.1} parent=0 // pred_check
    _
  $region63: #{model_forward.1} parent=0 // pred_check_branch
    %61 = sbr.rel (0) target = $region65
  $region64: #{model_forward.1} parent=0 // pred_region
    _
  $region65: #{model_forward.1} parent=0 // pred_fallthru
    _
  // Predicated region
  $region66: #{model_forward.1} parent=0 // pred_check
    _
  $region67: #{model_forward.1} parent=0 // pred_check_branch
    %63 = sbr.rel (0) target = $region69
  $region68: #{model_forward.1} parent=0 // pred_region
    _
  $region69: #{model_forward.1} parent=0 // pred_fallthru
    _
  // Predicated region
  $region70: #{model_forward.1} parent=0 // pred_check
    _
  $region71: #{model_forward.1} parent=0 // pred_check_branch
    %65 = sbr.rel (0) target = $region73
  $region72: #{model_forward.1} parent=0 // pred_region
    _
  $region73: #{model_forward.1} parent=0 // pred_fallthru
    _
  // Predicated region
  $region74: #{model_forward.1} parent=0 // pred_check
    _
  $region75: #{model_forward.1} parent=0 // pred_check_branch
    %67 = sbr.rel (0) target = $region77
  $region76: #{model_forward.1} parent=0 // pred_region
    _
  $region77: #{model_forward.1} parent=0 // pred_fallthru
    _
  // Predicated region
  $region78: #{model_forward.1} parent=0 // pred_check
    _
  $region79: #{model_forward.1} parent=0 // pred_check_branch
    %69 = sbr.rel (0) target = $region81
  $region80: #{model_forward.1} parent=0 // pred_region
    _
  $region81: #{model_forward.1} parent=0 // pred_fallthru
    _
  // Predicated region
  $region82: #{model_forward.1} parent=0 // pred_check
    _
  $region83: #{model_forward.1} parent=0 // pred_check_branch
    %71 = sbr.rel (0) target = $region85
  $region84: #{model_forward.1} parent=0 // pred_region
    _
  $region85: #{model_forward.1} parent=0 // pred_fallthru
    _
  // Predicated region
  $region86: #{model_forward.1} parent=0 // pred_check
    _
  $region87: #{model_forward.1} parent=0 // pred_check_branch
    %73 = sbr.rel (0) target = $region89
  $region88: #{model_forward.1} parent=0 // pred_region
    _
  $region89: #{model_forward.1} parent=0 // pred_fallthru
    _
  // Predicated region
  $region90: #{model_forward.1} parent=0 // pred_check
    _
  $region91: #{model_forward.1} parent=0 // pred_check_branch
    %75 = sbr.rel (0) target = $region93
  $region92: #{model_forward.1} parent=0 // pred_region
    _
  $region93: #{model_forward.1} parent=0 // pred_fallthru
    _
  %v77 = vld [vmem:[%s0] sm:$0xf]
  %v78 = vld [vmem:[%s0 + $0x4] sm:$0xf]
  %v79 = vld [vmem:[%s1] sm:$0xf]
  %v80 = vld [vmem:[%s2] sm:$0xf]
  %v81 = vld [vmem:[%s3] sm:$0xf]
  %v82 = vld [vmem:[%s3 + $0x4] sm:$0xf]
  %v83 = vld [vmem:[%s4] sm:$0xf]
  %v84 = vld [vmem:[%s4 + $0x4] sm:$0xf]
  %v85 = vld [vmem:[%s5] sm:$0x1]
  %v86 = vld [vmem:[%s6] sm:$0xf]
  %v87 = vld [vmem:[%s6 + $0x4] sm:$0x3]
  %v90 = vunpack.c.l.b16 %v77
  %v91 = vunpack.c.l.b16 %v78
  %v92 = vpack.c.b16 %v91, %v90
  %vm93 = vcmask 64512
  %v95 = vsel %vm93, %v92, 0
  %vm97 = vcmask 1043456
  %v99 = vsel %vm97, %v80, 0
  %101 = vmatpush.bf16.msra.mxu0 0
  %102 = vmatpush.bf16.msra.mxu0 0
  %103 = vmatpush.bf16.msra.mxu0 0
  %104 = vmatpush.bf16.msra.mxu0 0
  %105 = vmatpush.bf16.msra.mxu0 0
  %106 = vmatpush.bf16.msra.mxu0 0
  %107 = vmatpush.bf16.msra.mxu0 0
  %108 = vmatpush.bf16.msra.mxu0 %v99
  %109 = vmatmul.bf16.gmra.mxu0 %v95
  %v110 = vpop.f32.mrf.mxu0
  %v111 = vadd.f32 0.0, %v110
  %v112 = vpop.f32.mrf.mxu0
  %v113 = vadd.f32 0.0, %v112
  %114 = vdwg.mxu0
  %v115 = vpack.c.bf16 %v113, %v111
  %v117 = vperm.slane %v85, 0
  %v121 = vunpack.c.l.b16 %v83
  %v122 = vunpack.c.l.b16 %v84
  %v123 = vpack.c.b16 %v122, %v121
  %vm125 = vcmask 130048
  %v127 = vsel %vm125, %v115, 0
  %129 = vmatpush.bf16.msra.mxu0 0
  %130 = vmatpush.bf16.msra.mxu0 0
  %131 = vmatpush.bf16.msra.mxu0 0
  %132 = vmatpush.bf16.msra.mxu0 0
  %133 = vmatpush.bf16.msra.mxu0 0
  %134 = vmatpush.bf16.msra.mxu0 0
  %135 = vmatpush.bf16.msra.mxu0 0
  %136 = vmatpush.bf16.msra.mxu0 %v123
  %137 = vmatmul.bf16.gmra.mxu0 %v127
  %v138 = vpop.f32.mrf.mxu0
  %v139 = vadd.f32 %v117, %v138
  %v140 = vpop.f32.mrf.mxu0
  %v141 = vadd.f32 %v117, %v140
  %142 = vdwg.mxu0
  %v145 = vunpack.c.l.b16 %v81
  %v146 = vunpack.c.l.b16 %v82
  %v147 = vpack.c.b16 %v146, %v145
  %v150 = vunpack.c.l.b16 %v86
  %v151 = vunpack.c.l.b16 %v87
  %v152 = vpack.c.b16 %v151, %v150
  %vm153 = vcmask 97280
  %v155 = vsel %vm153, %v147, 0
  %vm157 = vcmask 1045504
  %v159 = vsel %vm157, %v152, 0
  %161 = vmatpush.bf16.msra.mxu0 0
  %162 = vmatpush.bf16.msra.mxu0 0
  %163 = vmatpush.bf16.msra.mxu0 0
  %164 = vmatpush.bf16.msra.mxu0 0
  %165 = vmatpush.bf16.msra.mxu0 0
  %166 = vmatpush.bf16.msra.mxu0 0
  %167 = vmatpush.bf16.msra.mxu0 0
  %168 = vmatpush.bf16.msra.mxu0 %v159
  %169 = vmatmul.bf16.gmra.mxu0 %v155
  %v170 = vpop.f32.mrf.mxu0
  %v171 = vadd.f32 0.0, %v170
  %v172 = vpop.f32.mrf.mxu0
  %v173 = vadd.f32 0.0, %v172
  %174 = vdwg.mxu0
  %v175 = vadd.f32 %v139, %v171
  %v176 = vadd.f32 %v141, %v173
  %v177 = vmax.f32 %v175, 0.0
  %v178 = vmax.f32 %v176, 0.0
  %v179 = vld [vmem:[%s7] sm:$0xf]
  %v180 = vld [vmem:[%s7 + $0x4] sm:$0x3]
  %v181 = vld [vmem:[%s8] sm:$0x1]
  %v182 = vld [vmem:[%s9] sm:$0xf]
  %v183 = vld [vmem:[%s9 + $0x4] sm:$0xf]
  %v186 = vsel %vm125, %v79, 0
  %188 = vmatpush.bf16.msra.mxu0 0
  %189 = vmatpush.bf16.msra.mxu0 0
  %190 = vmatpush.bf16.msra.mxu0 0
  %191 = vmatpush.bf16.msra.mxu0 0
  %192 = vmatpush.bf16.msra.mxu0 0
  %193 = vmatpush.bf16.msra.mxu0 0
  %194 = vmatpush.bf16.msra.mxu0 0
  %195 = vmatpush.bf16.msra.mxu0 %v147
  %196 = vmatmul.bf16.gmra.mxu0 %v186
  %v197 = vpop.f32.mrf.mxu0
  %v198 = vadd.f32 0.0, %v197
  %v199 = vpop.f32.mrf.mxu0
  %200 = vdwg.mxu0
  %v201 = vpack.c.bf16 %v198, %v198
  %v203 = vperm.slane %v181, 0
  %v207 = vunpack.c.l.b16 %v179
  %v208 = vunpack.c.l.b16 %v180
  %v209 = vpack.c.b16 %v208, %v207
  %v211 = vsel %vm153, %v201, 0
  %v214 = vsel %vm157, %v209, 0
  %216 = vmatpush.bf16.msra.mxu0 0
  %217 = vmatpush.bf16.msra.mxu0 0
  %218 = vmatpush.bf16.msra.mxu0 0
  %219 = vmatpush.bf16.msra.mxu0 0
  %220 = vmatpush.bf16.msra.mxu0 0
  %221 = vmatpush.bf16.msra.mxu0 0
  %222 = vmatpush.bf16.msra.mxu0 0
  %223 = vmatpush.bf16.msra.mxu0 %v214
  %224 = vmatmul.bf16.gmra.mxu0 %v211
  %v225 = vpop.f32.mrf.mxu0
  %v226 = vadd.f32 %v203, %v225
  %v227 = vpop.f32.mrf.mxu0
  %228 = vdwg.mxu0
  %v231 = vunpack.c.l.b16 %v182
  %v232 = vunpack.c.l.b16 %v183
  %v233 = vpack.c.b16 %v232, %v231
  %v235 = vsel %vm125, %v80, 0
  %237 = vmatpush.bf16.msra.mxu0 0
  %238 = vmatpush.bf16.msra.mxu0 0
  %239 = vmatpush.bf16.msra.mxu0 0
  %240 = vmatpush.bf16.msra.mxu0 0
  %241 = vmatpush.bf16.msra.mxu0 0
  %242 = vmatpush.bf16.msra.mxu0 0
  %243 = vmatpush.bf16.msra.mxu0 0
  %244 = vmatpush.bf16.msra.mxu0 %v233
  %245 = vmatmul.bf16.gmra.mxu0 %v235
  %v246 = vpop.f32.mrf.mxu0
  %v247 = vadd.f32 0.0, %v246
  %v248 = vpop.f32.mrf.mxu0
  %249 = vdwg.mxu0
  %v250 = vadd.f32 %v226, %v247
  %v251 = vmax.f32 %v250, 0.0
  %v252 = vpack.c.bf16 %v178, %v177
  %v253 = vpack.c.bf16 %v251, %v251
  %v254 = vld [vmem:[%s10] sm:$0xf]
  %v255 = vld [vmem:[%s10 + $0x4] sm:$0xf]
  %v256 = vld [vmem:[%s10 + $0x8] sm:$0xf]
  %v257 = vld [vmem:[%s10 + $0xc] sm:$0xf]
  %v258 = vld [vmem:[%s11] sm:$0x1]
  %v259 = vld [vmem:[%s12] sm:$0xf]
  %v260 = vld [vmem:[%s12 + $0x4] sm:$0xf]
  %v261 = vld [vmem:[%s12 + $0x8] sm:$0xf]
  %v262 = vld [vmem:[%s12 + $0xc] sm:$0xf]
  %v264 = vsel %vm97, %v253, 0
  %266 = vmatpush.bf16.msra.mxu0 0
  %267 = vmatpush.bf16.msra.mxu0 0
  %268 = vmatpush.bf16.msra.mxu0 0
  %269 = vmatpush.bf16.msra.mxu0 0
  %270 = vmatpush.bf16.msra.mxu0 0
  %271 = vmatpush.bf16.msra.mxu0 0
  %272 = vmatpush.bf16.msra.mxu0 0
  %273 = vmatpush.bf16.msra.mxu0 %v264
  %274 = vmatmul.bf16.gmra.mxu0 %v95
  %v275 = vpop.f32.mrf.mxu0
  %v276 = vadd.f32 0.0, %v275
  %v277 = vpop.f32.mrf.mxu0
  %v278 = vadd.f32 0.0, %v277
  %279 = vdwg.mxu0
  %v280 = vpack.c.bf16 %v278, %v276
  %v282 = vperm.slane %v258, 0
  %v288 = vunpack.c.l.b16 %v254
  %v289 = vunpack.c.l.b16 %v255
  %v290 = vunpack.c.l.b16 %v256
  %v291 = vunpack.c.l.b16 %v257
  %v292 = vpack.c.b16 %v289, %v288
  %v293 = vpack.c.b16 %v291, %v290
  %vm296 = vcmask 261120
  %v298 = vsel %vm296, %v280, 0
  %300 = vmatpush.bf16.msra.mxu0 0
  %301 = vmatpush.bf16.msra.mxu0 0
  %302 = vmatpush.bf16.msra.mxu0 0
  %303 = vmatpush.bf16.msra.mxu0 0
  %304 = vmatpush.bf16.msra.mxu0 0
  %305 = vmatpush.bf16.msra.mxu0 0
  %306 = vmatpush.bf16.msra.mxu0 %v293
  %307 = vmatpush.bf16.msra.mxu0 %v292
  %308 = vmatmul.bf16.gmra.mxu0 %v298
  %v309 = vpop.f32.mrf.mxu0
  %v310 = vadd.f32 %v282, %v309
  %v311 = vpop.f32.mrf.mxu0
  %v312 = vadd.f32 %v282, %v311
  %313 = vdwg.mxu0
  %v318 = vunpack.c.l.b16 %v259
  %v319 = vunpack.c.l.b16 %v260
  %v320 = vunpack.c.l.b16 %v261
  %v321 = vunpack.c.l.b16 %v262
  %v322 = vpack.c.b16 %v319, %v318
  %v323 = vpack.c.b16 %v321, %v320
  %v327 = vsel %vm296, %v252, 0
  %329 = vmatpush.bf16.msra.mxu0 0
  %330 = vmatpush.bf16.msra.mxu0 0
  %331 = vmatpush.bf16.msra.mxu0 0
  %332 = vmatpush.bf16.msra.mxu0 0
  %333 = vmatpush.bf16.msra.mxu0 0
  %334 = vmatpush.bf16.msra.mxu0 0
  %335 = vmatpush.bf16.msra.mxu0 %v323
  %336 = vmatpush.bf16.msra.mxu0 %v322
  %337 = vmatmul.bf16.gmra.mxu0 %v327
  %v338 = vpop.f32.mrf.mxu0
  %v339 = vadd.f32 0.0, %v338
  %v340 = vpop.f32.mrf.mxu0
  %v341 = vadd.f32 0.0, %v340
  %342 = vdwg.mxu0
  %v343 = vadd.f32 %v310, %v339
  %v344 = vadd.f32 %v312, %v341
  %v345 = vpack.c.bf16 %v344, %v343
  %v346 = vld [vmem:[%s13] sm:$0xf]
  %v347 = vld [vmem:[%s13 + $0x4] sm:$0xf]
  %v348 = vld [vmem:[%s13 + $0x8] sm:$0xf]
  %v349 = vld [vmem:[%s13 + $0xc] sm:$0xf]
  %v350 = vld [vmem:[%s14] sm:$0x1]
  %v351 = vld [vmem:[%s15] sm:$0xf]
  %v352 = vld [vmem:[%s15 + $0x4] sm:$0xf]
  %v353 = vld [vmem:[%s15 + $0x8] sm:$0xf]
  %v354 = vld [vmem:[%s15 + $0xc] sm:$0xf]
  %355 = vmatpush.bf16.msra.mxu0 0
  %356 = vmatpush.bf16.msra.mxu0 0
  %357 = vmatpush.bf16.msra.mxu0 0
  %358 = vmatpush.bf16.msra.mxu0 0
  %359 = vmatpush.bf16.msra.mxu0 0
  %360 = vmatpush.bf16.msra.mxu0 0
  %361 = vmatpush.bf16.msra.mxu0 0
  %362 = vmatpush.bf16.msra.mxu0 %v252
  %363 = vmatmul.bf16.gmra.mxu0 %v186
  %v364 = vpop.f32.mrf.mxu0
  %v365 = vadd.f32 0.0, %v364
  %v366 = vpop.f32.mrf.mxu0
  %367 = vdwg.mxu0
  %v368 = vpack.c.bf16 %v365, %v365
  %v370 = vperm.slane %v350, 0
  %v376 = vunpack.c.l.b16 %v346
  %v377 = vunpack.c.l.b16 %v347
  %v378 = vunpack.c.l.b16 %v348
  %v379 = vunpack.c.l.b16 %v349
  %v380 = vpack.c.b16 %v377, %v376
  %v381 = vpack.c.b16 %v379, %v378
  %v385 = vsel %vm296, %v368, 0
  %387 = vmatpush.bf16.msra.mxu0 0
  %388 = vmatpush.bf16.msra.mxu0 0
  %389 = vmatpush.bf16.msra.mxu0 0
  %390 = vmatpush.bf16.msra.mxu0 0
  %391 = vmatpush.bf16.msra.mxu0 0
  %392 = vmatpush.bf16.msra.mxu0 0
  %393 = vmatpush.bf16.msra.mxu0 %v381
  %394 = vmatpush.bf16.msra.mxu0 %v380
  %395 = vmatmul.bf16.gmra.mxu0 %v385
  %v396 = vpop.f32.mrf.mxu0
  %v397 = vadd.f32 %v370, %v396
  %v398 = vpop.f32.mrf.mxu0
  %399 = vdwg.mxu0
  %v404 = vunpack.c.l.b16 %v351
  %v405 = vunpack.c.l.b16 %v352
  %v406 = vunpack.c.l.b16 %v353
  %v407 = vunpack.c.l.b16 %v354
  %v408 = vpack.c.b16 %v405, %v404
  %v409 = vpack.c.b16 %v407, %v406
  %v412 = vsel %vm296, %v253, 0
  %414 = vmatpush.bf16.msra.mxu0 0
  %415 = vmatpush.bf16.msra.mxu0 0
  %416 = vmatpush.bf16.msra.mxu0 0
  %417 = vmatpush.bf16.msra.mxu0 0
  %418 = vmatpush.bf16.msra.mxu0 0
  %419 = vmatpush.bf16.msra.mxu0 0
  %420 = vmatpush.bf16.msra.mxu0 %v409
  %421 = vmatpush.bf16.msra.mxu0 %v408
  %422 = vmatmul.bf16.gmra.mxu0 %v412
  %v423 = vpop.f32.mrf.mxu0
  %v424 = vadd.f32 0.0, %v423
  %v425 = vpop.f32.mrf.mxu0
  %426 = vdwg.mxu0
  %v427 = vadd.f32 %v397, %v424
  %v428 = vpack.c.bf16 %v427, %v427
  %v429 = vld [vmem:[%s16] sm:$0xf]
  %v430 = vld [vmem:[%s16 + $0x4] sm:$0xf]
  %v431 = vld [vmem:[%s16 + $0x8] sm:$0xf]
  %v432 = vld [vmem:[%s16 + $0xc] sm:$0xf]
  %v433 = vld [vmem:[%s16 + $0x10] sm:$0xf]
  %v434 = vld [vmem:[%s16 + $0x14] sm:$0xf]
  %v435 = vld [vmem:[%s16 + $0x18] sm:$0xf]
  %v436 = vld [vmem:[%s16 + $0x1c] sm:$0xf]
  %v437 = vld [vmem:[%s16 + $0x20] sm:$0xf]
  %v438 = vld [vmem:[%s16 + $0x24] sm:$0xf]
  %v439 = vld [vmem:[%s16 + $0x28] sm:$0xf]
  %v440 = vld [vmem:[%s16 + $0x2c] sm:$0xf]
  %v441 = vld [vmem:[%s16 + $0x30] sm:$0xf]
  %v442 = vld [vmem:[%s16 + $0x34] sm:$0xf]
  %v443 = vld [vmem:[%s16 + $0x38] sm:$0xf]
  %v444 = vld [vmem:[%s16 + $0x3c] sm:$0xf]
  %v461 = vunpack.c.l.b16 %v429
  %v462 = vunpack.c.l.b16 %v430
  %v463 = vunpack.c.l.b16 %v431
  %v464 = vunpack.c.l.b16 %v432
  %v465 = vunpack.c.l.b16 %v433
  %v466 = vunpack.c.l.b16 %v434
  %v467 = vunpack.c.l.b16 %v435
  %v468 = vunpack.c.l.b16 %v436
  %v469 = vunpack.c.l.b16 %v437
  %v470 = vunpack.c.l.b16 %v438
  %v471 = vunpack.c.l.b16 %v439
  %v472 = vunpack.c.l.b16 %v440
  %v473 = vunpack.c.l.b16 %v441
  %v474 = vunpack.c.l.b16 %v442
  %v475 = vunpack.c.l.b16 %v443
  %v476 = vunpack.c.l.b16 %v444
  %v477 = vpack.c.b16 %v462, %v461
  %v478 = vpack.c.b16 %v464, %v463
  %v479 = vpack.c.b16 %v466, %v465
  %v480 = vpack.c.b16 %v468, %v467
  %v481 = vpack.c.b16 %v470, %v469
  %v482 = vpack.c.b16 %v472, %v471
  %v483 = vpack.c.b16 %v474, %v473
  %v484 = vpack.c.b16 %v476, %v475
  %v486 = vsel %vm93, %v477, 0
  %v489 = vsel %vm93, %v478, 0
  %v492 = vsel %vm93, %v479, 0
  %v495 = vsel %vm93, %v480, 0
  %v498 = vsel %vm93, %v481, 0
  %v501 = vsel %vm93, %v482, 0
  %v504 = vsel %vm93, %v483, 0
  %v507 = vsel %vm93, %v484, 0
  %v510 = vsel %vm97, %v428, 0
  %512 = vmatpush.bf16.msra.mxu0 0
  %513 = vmatpush.bf16.msra.mxu0 0
  %514 = vmatpush.bf16.msra.mxu0 0
  %515 = vmatpush.bf16.msra.mxu0 0
  %516 = vmatpush.bf16.msra.mxu0 0
  %517 = vmatpush.bf16.msra.mxu0 0
  %518 = vmatpush.bf16.msra.mxu0 0
  %519 = vmatpush.bf16.msra.mxu0 %v510
  %520 = vmatmul.bf16.gmra.mxu0 %v486
  %v521 = vpop.f32.mrf.mxu0
  %v522 = vadd.f32 0.0, %v521
  %v523 = vpop.f32.mrf.mxu0
  %v524 = vadd.f32 0.0, %v523
  %525 = vmatmul.bf16.gmra.mxu0 %v489
  %v526 = vpop.f32.mrf.mxu0
  %v527 = vadd.f32 0.0, %v526
  %v528 = vpop.f32.mrf.mxu0
  %v529 = vadd.f32 0.0, %v528
  %530 = vmatmul.bf16.gmra.mxu0 %v492
  %v531 = vpop.f32.mrf.mxu0
  %v532 = vadd.f32 0.0, %v531
  %v533 = vpop.f32.mrf.mxu0
  %v534 = vadd.f32 0.0, %v533
  %535 = vmatmul.bf16.gmra.mxu0 %v495
  %v536 = vpop.f32.mrf.mxu0
  %v537 = vadd.f32 0.0, %v536
  %v538 = vpop.f32.mrf.mxu0
  %v539 = vadd.f32 0.0, %v538
  %540 = vmatmul.bf16.gmra.mxu0 %v498
  %v541 = vpop.f32.mrf.mxu0
  %v542 = vadd.f32 0.0, %v541
  %v543 = vpop.f32.mrf.mxu0
  %v544 = vadd.f32 0.0, %v543
  %545 = vmatmul.bf16.gmra.mxu0 %v501
  %v546 = vpop.f32.mrf.mxu0
  %v547 = vadd.f32 0.0, %v546
  %v548 = vpop.f32.mrf.mxu0
  %v549 = vadd.f32 0.0, %v548
  %550 = vmatmul.bf16.gmra.mxu0 %v504
  %v551 = vpop.f32.mrf.mxu0
  %v552 = vadd.f32 0.0, %v551
  %v553 = vpop.f32.mrf.mxu0
  %v554 = vadd.f32 0.0, %v553
  %555 = vmatmul.bf16.gmra.mxu0 %v507
  %v556 = vpop.f32.mrf.mxu0
  %v557 = vadd.f32 0.0, %v556
  %v558 = vpop.f32.mrf.mxu0
  %v559 = vadd.f32 0.0, %v558
  %560 = vdwg.mxu0
  %v561 = vpack.c.bf16 %v524, %v522
  %v562 = vpack.c.bf16 %v529, %v527
  %v563 = vpack.c.bf16 %v534, %v532
  %v564 = vpack.c.bf16 %v539, %v537
  %v565 = vpack.c.bf16 %v544, %v542
  %v566 = vpack.c.bf16 %v549, %v547
  %v567 = vpack.c.bf16 %v554, %v552
  %v568 = vpack.c.bf16 %v559, %v557
  %v569 = vld [vmem:[%s17] sm:$0xf]
  %v570 = vld [vmem:[%s17 + $0x4] sm:$0xf]
  %v571 = vld [vmem:[%s17 + $0x8] sm:$0xf]
  %v572 = vld [vmem:[%s17 + $0xc] sm:$0xf]
  %v573 = vld [vmem:[%s17 + $0x10] sm:$0xf]
  %v574 = vld [vmem:[%s17 + $0x14] sm:$0xf]
  %v575 = vld [vmem:[%s17 + $0x18] sm:$0xf]
  %v576 = vld [vmem:[%s17 + $0x1c] sm:$0xf]
  %v577 = vld [vmem:[%s17 + $0x20] sm:$0xf]
  %v578 = vld [vmem:[%s17 + $0x24] sm:$0xf]
  %v579 = vld [vmem:[%s17 + $0x28] sm:$0xf]
  %v580 = vld [vmem:[%s17 + $0x2c] sm:$0xf]
  %v581 = vld [vmem:[%s17 + $0x30] sm:$0xf]
  %v582 = vld [vmem:[%s17 + $0x34] sm:$0xf]
  %v583 = vld [vmem:[%s17 + $0x38] sm:$0xf]
  %v584 = vld [vmem:[%s17 + $0x3c] sm:$0xf]
  %v601 = vunpack.c.l.b16 %v569
  %v602 = vunpack.c.l.b16 %v570
  %v603 = vunpack.c.l.b16 %v571
  %v604 = vunpack.c.l.b16 %v572
  %v605 = vunpack.c.l.b16 %v573
  %v606 = vunpack.c.l.b16 %v574
  %v607 = vunpack.c.l.b16 %v575
  %v608 = vunpack.c.l.b16 %v576
  %v609 = vunpack.c.l.b16 %v577
  %v610 = vunpack.c.l.b16 %v578
  %v611 = vunpack.c.l.b16 %v579
  %v612 = vunpack.c.l.b16 %v580
  %v613 = vunpack.c.l.b16 %v581
  %v614 = vunpack.c.l.b16 %v582
  %v615 = vunpack.c.l.b16 %v583
  %v616 = vunpack.c.l.b16 %v584
  %v617 = vpack.c.b16 %v602, %v601
  %v618 = vpack.c.b16 %v604, %v603
  %v619 = vpack.c.b16 %v606, %v605
  %v620 = vpack.c.b16 %v608, %v607
  %v621 = vpack.c.b16 %v610, %v609
  %v622 = vpack.c.b16 %v612, %v611
  %v623 = vpack.c.b16 %v614, %v613
  %v624 = vpack.c.b16 %v616, %v615
  %v626 = vsel %vm125, %v617, 0
  %v629 = vsel %vm125, %v618, 0
  %v632 = vsel %vm125, %v619, 0
  %v635 = vsel %vm125, %v620, 0
  %v638 = vsel %vm125, %v621, 0
  %v641 = vsel %vm125, %v622, 0
  %v644 = vsel %vm125, %v623, 0
  %v647 = vsel %vm125, %v624, 0
  %649 = vmatpush.bf16.msra.mxu0 0
  %650 = vmatpush.bf16.msra.mxu0 0
  %651 = vmatpush.bf16.msra.mxu0 0
  %652 = vmatpush.bf16.msra.mxu0 0
  %653 = vmatpush.bf16.msra.mxu0 0
  %654 = vmatpush.bf16.msra.mxu0 0
  %655 = vmatpush.bf16.msra.mxu0 0
  %656 = vmatpush.bf16.msra.mxu0 %v345
  %657 = vmatmul.bf16.gmra.mxu0 %v626
  %v658 = vpop.f32.mrf.mxu0
  %v659 = vadd.f32 0.0, %v658
  %v660 = vpop.f32.mrf.mxu0
  %v661 = vadd.f32 0.0, %v660
  %662 = vmatmul.bf16.gmra.mxu0 %v629
  %v663 = vpop.f32.mrf.mxu0
  %v664 = vadd.f32 0.0, %v663
  %v665 = vpop.f32.mrf.mxu0
  %v666 = vadd.f32 0.0, %v665
  %667 = vmatmul.bf16.gmra.mxu0 %v632
  %v668 = vpop.f32.mrf.mxu0
  %v669 = vadd.f32 0.0, %v668
  %v670 = vpop.f32.mrf.mxu0
  %v671 = vadd.f32 0.0, %v670
  %672 = vmatmul.bf16.gmra.mxu0 %v635
  %v673 = vpop.f32.mrf.mxu0
  %v674 = vadd.f32 0.0, %v673
  %v675 = vpop.f32.mrf.mxu0
  %v676 = vadd.f32 0.0, %v675
  %677 = vmatmul.bf16.gmra.mxu0 %v638
  %v678 = vpop.f32.mrf.mxu0
  %v679 = vadd.f32 0.0, %v678
  %v680 = vpop.f32.mrf.mxu0
  %v681 = vadd.f32 0.0, %v680
  %682 = vmatmul.bf16.gmra.mxu0 %v641
  %v683 = vpop.f32.mrf.mxu0
  %v684 = vadd.f32 0.0, %v683
  %v685 = vpop.f32.mrf.mxu0
  %v686 = vadd.f32 0.0, %v685
  %687 = vmatmul.bf16.gmra.mxu0 %v644
  %v688 = vpop.f32.mrf.mxu0
  %v689 = vadd.f32 0.0, %v688
  %v690 = vpop.f32.mrf.mxu0
  %v691 = vadd.f32 0.0, %v690
  %692 = vmatmul.bf16.gmra.mxu0 %v647
  %v693 = vpop.f32.mrf.mxu0
  %v694 = vadd.f32 0.0, %v693
  %v695 = vpop.f32.mrf.mxu0
  %v696 = vadd.f32 0.0, %v695
  %697 = vdwg.mxu0
  %v698 = vpack.c.bf16 %v661, %v659
  %v699 = vpack.c.bf16 %v666, %v664
  %v700 = vpack.c.bf16 %v671, %v669
  %v701 = vpack.c.bf16 %v676, %v674
  %v702 = vpack.c.bf16 %v681, %v679
  %v703 = vpack.c.bf16 %v686, %v684
  %v704 = vpack.c.bf16 %v691, %v689
  %v705 = vpack.c.bf16 %v696, %v694
  %v706 = vld [vmem:[%s18] sm:$0xf]
  %v707 = vld [vmem:[%s18 + $0x4] sm:$0xf]
  %v708 = vld [vmem:[%s18 + $0x8] sm:$0xf]
  %v709 = vld [vmem:[%s18 + $0xc] sm:$0xf]
  %v710 = vld [vmem:[%s19] sm:$0xf]
  %v711 = vld [vmem:[%s19 + $0x4] sm:$0xf]
  %v712 = vld [vmem:[%s19 + $0x8] sm:$0xf]
  %v713 = vld [vmem:[%s19 + $0xc] sm:$0xf]
  %v718 = vunpack.c.l.b16 %v710
  %v719 = vunpack.c.l.b16 %v711
  %v720 = vunpack.c.l.b16 %v712
  %v721 = vunpack.c.l.b16 %v713
  %v722 = vpack.c.b16 %v719, %v718
  %v723 = vpack.c.b16 %v721, %v720
  %v727 = vsel %vm296, %v698, 0
  %v730 = vsel %vm296, %v699, 0
  %v733 = vsel %vm296, %v700, 0
  %v736 = vsel %vm296, %v701, 0
  %v739 = vsel %vm296, %v702, 0
  %v742 = vsel %vm296, %v703, 0
  %v745 = vsel %vm296, %v704, 0
  %v748 = vsel %vm296, %v705, 0
  %750 = vmatpush.bf16.msra.mxu0 0
  %751 = vmatpush.bf16.msra.mxu0 0
  %752 = vmatpush.bf16.msra.mxu0 0
  %753 = vmatpush.bf16.msra.mxu0 0
  %754 = vmatpush.bf16.msra.mxu0 0
  %755 = vmatpush.bf16.msra.mxu0 0
  %756 = vmatpush.bf16.msra.mxu0 %v723
  %757 = vmatpush.bf16.msra.mxu0 %v722
  %758 = vmatmul.bf16.gmra.mxu0 %v727
  %v759 = vpop.f32.mrf.mxu0
  %v760 = vadd.f32 0.0, %v759
  %v761 = vpop.f32.mrf.mxu0
  %v762 = vadd.f32 0.0, %v761
  %763 = vmatmul.bf16.gmra.mxu0 %v730
  %v764 = vpop.f32.mrf.mxu0
  %v765 = vadd.f32 0.0, %v764
  %v766 = vpop.f32.mrf.mxu0
  %v767 = vadd.f32 0.0, %v766
  %768 = vmatmul.bf16.gmra.mxu0 %v733
  %v769 = vpop.f32.mrf.mxu0
  %v770 = vadd.f32 0.0, %v769
  %v771 = vpop.f32.mrf.mxu0
  %v772 = vadd.f32 0.0, %v771
  %773 = vmatmul.bf16.gmra.mxu0 %v736
  %v774 = vpop.f32.mrf.mxu0
  %v775 = vadd.f32 0.0, %v774
  %v776 = vpop.f32.mrf.mxu0
  %v777 = vadd.f32 0.0, %v776
  %778 = vmatmul.bf16.gmra.mxu0 %v739
  %v779 = vpop.f32.mrf.mxu0
  %v780 = vadd.f32 0.0, %v779
  %v781 = vpop.f32.mrf.mxu0
  %v782 = vadd.f32 0.0, %v781
  %783 = vmatmul.bf16.gmra.mxu0 %v742
  %v784 = vpop.f32.mrf.mxu0
  %v785 = vadd.f32 0.0, %v784
  %v786 = vpop.f32.mrf.mxu0
  %v787 = vadd.f32 0.0, %v786
  %788 = vmatmul.bf16.gmra.mxu0 %v745
  %v789 = vpop.f32.mrf.mxu0
  %v790 = vadd.f32 0.0, %v789
  %v791 = vpop.f32.mrf.mxu0
  %v792 = vadd.f32 0.0, %v791
  %793 = vmatmul.bf16.gmra.mxu0 %v748
  %v794 = vpop.f32.mrf.mxu0
  %v795 = vadd.f32 0.0, %v794
  %v796 = vpop.f32.mrf.mxu0
  %v797 = vadd.f32 0.0, %v796
  %798 = vdwg.mxu0
  %v803 = vunpack.c.l.b16 %v706
  %v804 = vunpack.c.l.b16 %v707
  %v805 = vunpack.c.l.b16 %v708
  %v806 = vunpack.c.l.b16 %v709
  %v807 = vpack.c.b16 %v804, %v803
  %v808 = vpack.c.b16 %v806, %v805
  %v812 = vsel %vm296, %v561, 0
  %v815 = vsel %vm296, %v562, 0
  %v818 = vsel %vm296, %v563, 0
  %v821 = vsel %vm296, %v564, 0
  %v824 = vsel %vm296, %v565, 0
  %v827 = vsel %vm296, %v566, 0
  %v830 = vsel %vm296, %v567, 0
  %v833 = vsel %vm296, %v568, 0
  %835 = vmatpush.bf16.msra.mxu0 0
  %836 = vmatpush.bf16.msra.mxu0 0
  %837 = vmatpush.bf16.msra.mxu0 0
  %838 = vmatpush.bf16.msra.mxu0 0
  %839 = vmatpush.bf16.msra.mxu0 0
  %840 = vmatpush.bf16.msra.mxu0 0
  %841 = vmatpush.bf16.msra.mxu0 %v808
  %842 = vmatpush.bf16.msra.mxu0 %v807
  %843 = vmatmul.bf16.gmra.mxu0 %v812
  %v844 = vpop.f32.mrf.mxu0
  %v845 = vadd.f32 %v760, %v844
  %v846 = vpop.f32.mrf.mxu0
  %v847 = vadd.f32 %v762, %v846
  %848 = vmatmul.bf16.gmra.mxu0 %v815
  %v849 = vpop.f32.mrf.mxu0
  %v850 = vadd.f32 %v765, %v849
  %v851 = vpop.f32.mrf.mxu0
  %v852 = vadd.f32 %v767, %v851
  %853 = vmatmul.bf16.gmra.mxu0 %v818
  %v854 = vpop.f32.mrf.mxu0
  %v855 = vadd.f32 %v770, %v854
  %v856 = vpop.f32.mrf.mxu0
  %v857 = vadd.f32 %v772, %v856
  %858 = vmatmul.bf16.gmra.mxu0 %v821
  %v859 = vpop.f32.mrf.mxu0
  %v860 = vadd.f32 %v775, %v859
  %v861 = vpop.f32.mrf.mxu0
  %v862 = vadd.f32 %v777, %v861
  %863 = vmatmul.bf16.gmra.mxu0 %v824
  %v864 = vpop.f32.mrf.mxu0
  %v865 = vadd.f32 %v780, %v864
  %v866 = vpop.f32.mrf.mxu0
  %v867 = vadd.f32 %v782, %v866
  %868 = vmatmul.bf16.gmra.mxu0 %v827
  %v869 = vpop.f32.mrf.mxu0
  %v870 = vadd.f32 %v785, %v869
  %v871 = vpop.f32.mrf.mxu0
  %v872 = vadd.f32 %v787, %v871
  %873 = vmatmul.bf16.gmra.mxu0 %v830
  %v874 = vpop.f32.mrf.mxu0
  %v875 = vadd.f32 %v790, %v874
  %v876 = vpop.f32.mrf.mxu0
  %v877 = vadd.f32 %v792, %v876
  %878 = vmatmul.bf16.gmra.mxu0 %v833
  %v879 = vpop.f32.mrf.mxu0
  %v880 = vadd.f32 %v795, %v879
  %v881 = vpop.f32.mrf.mxu0
  %v882 = vadd.f32 %v797, %v881
  %883 = vdwg.mxu0
  %v884 = vld [vmem:[%s20] sm:$0x1]
  %v886 = vperm.slane %v884, 0
  %v888 = vadd.f32 %v845, %v886
  %v889 = vadd.f32 %v847, %v886
  %v890 = vadd.f32 %v850, %v886
  %v891 = vadd.f32 %v852, %v886
  %v892 = vadd.f32 %v855, %v886
  %v893 = vadd.f32 %v857, %v886
  %v894 = vadd.f32 %v860, %v886
  %v895 = vadd.f32 %v862, %v886
  %v896 = vadd.f32 %v865, %v886
  %v897 = vadd.f32 %v867, %v886
  %v898 = vadd.f32 %v870, %v886
  %v899 = vadd.f32 %v872, %v886
  %v900 = vadd.f32 %v875, %v886
  %v901 = vadd.f32 %v877, %v886
  %v902 = vadd.f32 %v880, %v886
  %v903 = vadd.f32 %v882, %v886
  %v904 = vxor.u32 %v888, 2147483648
  %v905 = vxor.u32 %v889, 2147483648
  %v906 = vxor.u32 %v890, 2147483648
  %v907 = vxor.u32 %v891, 2147483648
  %v908 = vxor.u32 %v892, 2147483648
  %v909 = vxor.u32 %v893, 2147483648
  %v910 = vxor.u32 %v894, 2147483648
  %v911 = vxor.u32 %v895, 2147483648
  %v912 = vxor.u32 %v896, 2147483648
  %v913 = vxor.u32 %v897, 2147483648
  %v914 = vxor.u32 %v898, 2147483648
  %v915 = vxor.u32 %v899, 2147483648
  %v916 = vxor.u32 %v900, 2147483648
  %v917 = vxor.u32 %v901, 2147483648
  %v918 = vxor.u32 %v902, 2147483648
  %v919 = vxor.u32 %v903, 2147483648
  %v920 = vmul.f32 %v904, 1.442695
  %v921 = vpow.pop %v920
  %v922 = vmul.f32 %v905, 1.442695
  %v923 = vpow.pop %v922
  %v924 = vmul.f32 %v906, 1.442695
  %v925 = vpow.pop %v924
  %v926 = vmul.f32 %v907, 1.442695
  %v927 = vpow.pop %v926
  %v928 = vmul.f32 %v908, 1.442695
  %v929 = vpow.pop %v928
  %v930 = vmul.f32 %v909, 1.442695
  %v931 = vpow.pop %v930
  %v932 = vmul.f32 %v910, 1.442695
  %v933 = vpow.pop %v932
  %v934 = vmul.f32 %v911, 1.442695
  %v935 = vpow.pop %v934
  %v936 = vmul.f32 %v912, 1.442695
  %v937 = vpow.pop %v936
  %v938 = vmul.f32 %v913, 1.442695
  %v939 = vpow.pop %v938
  %v940 = vmul.f32 %v914, 1.442695
  %v941 = vpow.pop %v940
  %v942 = vmul.f32 %v915, 1.442695
  %v943 = vpow.pop %v942
  %v944 = vmul.f32 %v916, 1.442695
  %v945 = vpow.pop %v944
  %v946 = vmul.f32 %v917, 1.442695
  %v947 = vpow.pop %v946
  %v948 = vmul.f32 %v918, 1.442695
  %v949 = vpow.pop %v948
  %v950 = vmul.f32 %v919, 1.442695
  %v951 = vpow.pop %v950
  %v952 = vadd.f32 %v921, 1.0
  %v953 = vadd.f32 %v923, 1.0
  %v954 = vadd.f32 %v925, 1.0
  %v955 = vadd.f32 %v927, 1.0
  %v956 = vadd.f32 %v929, 1.0
  %v957 = vadd.f32 %v931, 1.0
  %v958 = vadd.f32 %v933, 1.0
  %v959 = vadd.f32 %v935, 1.0
  %v960 = vadd.f32 %v937, 1.0
  %v961 = vadd.f32 %v939, 1.0
  %v962 = vadd.f32 %v941, 1.0
  %v963 = vadd.f32 %v943, 1.0
  %v964 = vadd.f32 %v945, 1.0
  %v965 = vadd.f32 %v947, 1.0
  %v966 = vadd.f32 %v949, 1.0
  %v967 = vadd.f32 %v951, 1.0
  %v968 = vrcp.pop %v952
  %v969 = vmul.f32 %v952, %v968
  %v970 = vsub.f32 1.0, %v969
  %v971 = vmul.f32 %v968, %v970
  %v972 = vadd.f32 %v968, %v971
  %vm973 = vweird.f32 %v952
  %vm974 = vweird.f32 %v968
  %vm975 = vmor %vm973, %vm974
  %v976 = vsel %vm975, %v968, %v972
  %v977 = vand.u32 2147483647, %v952
  %vm978 = vcmp.eq.f32.partialorder %v977, 8.507059e+37
  %v979 = vand.u32 %v952, 2147483648
  %v980 = vor.u32 1.1754944e-38, %v979
  %v981 = vsel %vm978, %v980, %v976
  %v982 = vmul.f32 1.0, %v981
  %v983 = vrcp.pop %v953
  %v984 = vmul.f32 %v953, %v983
  %v985 = vsub.f32 1.0, %v984
  %v986 = vmul.f32 %v983, %v985
  %v987 = vadd.f32 %v983, %v986
  %vm988 = vweird.f32 %v953
  %vm989 = vweird.f32 %v983
  %vm990 = vmor %vm988, %vm989
  %v991 = vsel %vm990, %v983, %v987
  %v992 = vand.u32 2147483647, %v953
  %vm993 = vcmp.eq.f32.partialorder %v992, 8.507059e+37
  %v994 = vand.u32 %v953, 2147483648
  %v995 = vor.u32 1.1754944e-38, %v994
  %v996 = vsel %vm993, %v995, %v991
  %v997 = vmul.f32 1.0, %v996
  %v998 = vrcp.pop %v954
  %v999 = vmul.f32 %v954, %v998
  %v1000 = vsub.f32 1.0, %v999
  %v1001 = vmul.f32 %v998, %v1000
  %v1002 = vadd.f32 %v998, %v1001
  %vm1003 = vweird.f32 %v954
  %vm1004 = vweird.f32 %v998
  %vm1005 = vmor %vm1003, %vm1004
  %v1006 = vsel %vm1005, %v998, %v1002
  %v1007 = vand.u32 2147483647, %v954
  %vm1008 = vcmp.eq.f32.partialorder %v1007, 8.507059e+37
  %v1009 = vand.u32 %v954, 2147483648
  %v1010 = vor.u32 1.1754944e-38, %v1009
  %v1011 = vsel %vm1008, %v1010, %v1006
  %v1012 = vmul.f32 1.0, %v1011
  %v1013 = vrcp.pop %v955
  %v1014 = vmul.f32 %v955, %v1013
  %v1015 = vsub.f32 1.0, %v1014
  %v1016 = vmul.f32 %v1013, %v1015
  %v1017 = vadd.f32 %v1013, %v1016
  %vm1018 = vweird.f32 %v955
  %vm1019 = vweird.f32 %v1013
  %vm1020 = vmor %vm1018, %vm1019
  %v1021 = vsel %vm1020, %v1013, %v1017
  %v1022 = vand.u32 2147483647, %v955
  %vm1023 = vcmp.eq.f32.partialorder %v1022, 8.507059e+37
  %v1024 = vand.u32 %v955, 2147483648
  %v1025 = vor.u32 1.1754944e-38, %v1024
  %v1026 = vsel %vm1023, %v1025, %v1021
  %v1027 = vmul.f32 1.0, %v1026
  %v1028 = vrcp.pop %v956
  %v1029 = vmul.f32 %v956, %v1028
  %v1030 = vsub.f32 1.0, %v1029
  %v1031 = vmul.f32 %v1028, %v1030
  %v1032 = vadd.f32 %v1028, %v1031
  %vm1033 = vweird.f32 %v956
  %vm1034 = vweird.f32 %v1028
  %vm1035 = vmor %vm1033, %vm1034
  %v1036 = vsel %vm1035, %v1028, %v1032
  %v1037 = vand.u32 2147483647, %v956
  %vm1038 = vcmp.eq.f32.partialorder %v1037, 8.507059e+37
  %v1039 = vand.u32 %v956, 2147483648
  %v1040 = vor.u32 1.1754944e-38, %v1039
  %v1041 = vsel %vm1038, %v1040, %v1036
  %v1042 = vmul.f32 1.0, %v1041
  %v1043 = vrcp.pop %v957
  %v1044 = vmul.f32 %v957, %v1043
  %v1045 = vsub.f32 1.0, %v1044
  %v1046 = vmul.f32 %v1043, %v1045
  %v1047 = vadd.f32 %v1043, %v1046
  %vm1048 = vweird.f32 %v957
  %vm1049 = vweird.f32 %v1043
  %vm1050 = vmor %vm1048, %vm1049
  %v1051 = vsel %vm1050, %v1043, %v1047
  %v1052 = vand.u32 2147483647, %v957
  %vm1053 = vcmp.eq.f32.partialorder %v1052, 8.507059e+37
  %v1054 = vand.u32 %v957, 2147483648
  %v1055 = vor.u32 1.1754944e-38, %v1054
  %v1056 = vsel %vm1053, %v1055, %v1051
  %v1057 = vmul.f32 1.0, %v1056
  %v1058 = vrcp.pop %v958
  %v1059 = vmul.f32 %v958, %v1058
  %v1060 = vsub.f32 1.0, %v1059
  %v1061 = vmul.f32 %v1058, %v1060
  %v1062 = vadd.f32 %v1058, %v1061
  %vm1063 = vweird.f32 %v958
  %vm1064 = vweird.f32 %v1058
  %vm1065 = vmor %vm1063, %vm1064
  %v1066 = vsel %vm1065, %v1058, %v1062
  %v1067 = vand.u32 2147483647, %v958
  %vm1068 = vcmp.eq.f32.partialorder %v1067, 8.507059e+37
  %v1069 = vand.u32 %v958, 2147483648
  %v1070 = vor.u32 1.1754944e-38, %v1069
  %v1071 = vsel %vm1068, %v1070, %v1066
  %v1072 = vmul.f32 1.0, %v1071
  %v1073 = vrcp.pop %v959
  %v1074 = vmul.f32 %v959, %v1073
  %v1075 = vsub.f32 1.0, %v1074
  %v1076 = vmul.f32 %v1073, %v1075
  %v1077 = vadd.f32 %v1073, %v1076
  %vm1078 = vweird.f32 %v959
  %vm1079 = vweird.f32 %v1073
  %vm1080 = vmor %vm1078, %vm1079
  %v1081 = vsel %vm1080, %v1073, %v1077
  %v1082 = vand.u32 2147483647, %v959
  %vm1083 = vcmp.eq.f32.partialorder %v1082, 8.507059e+37
  %v1084 = vand.u32 %v959, 2147483648
  %v1085 = vor.u32 1.1754944e-38, %v1084
  %v1086 = vsel %vm1083, %v1085, %v1081
  %v1087 = vmul.f32 1.0, %v1086
  %v1088 = vrcp.pop %v960
  %v1089 = vmul.f32 %v960, %v1088
  %v1090 = vsub.f32 1.0, %v1089
  %v1091 = vmul.f32 %v1088, %v1090
  %v1092 = vadd.f32 %v1088, %v1091
  %vm1093 = vweird.f32 %v960
  %vm1094 = vweird.f32 %v1088
  %vm1095 = vmor %vm1093, %vm1094
  %v1096 = vsel %vm1095, %v1088, %v1092
  %v1097 = vand.u32 2147483647, %v960
  %vm1098 = vcmp.eq.f32.partialorder %v1097, 8.507059e+37
  %v1099 = vand.u32 %v960, 2147483648
  %v1100 = vor.u32 1.1754944e-38, %v1099
  %v1101 = vsel %vm1098, %v1100, %v1096
  %v1102 = vmul.f32 1.0, %v1101
  %v1103 = vrcp.pop %v961
  %v1104 = vmul.f32 %v961, %v1103
  %v1105 = vsub.f32 1.0, %v1104
  %v1106 = vmul.f32 %v1103, %v1105
  %v1107 = vadd.f32 %v1103, %v1106
  %vm1108 = vweird.f32 %v961
  %vm1109 = vweird.f32 %v1103
  %vm1110 = vmor %vm1108, %vm1109
  %v1111 = vsel %vm1110, %v1103, %v1107
  %v1112 = vand.u32 2147483647, %v961
  %vm1113 = vcmp.eq.f32.partialorder %v1112, 8.507059e+37
  %v1114 = vand.u32 %v961, 2147483648
  %v1115 = vor.u32 1.1754944e-38, %v1114
  %v1116 = vsel %vm1113, %v1115, %v1111
  %v1117 = vmul.f32 1.0, %v1116
  %v1118 = vrcp.pop %v962
  %v1119 = vmul.f32 %v962, %v1118
  %v1120 = vsub.f32 1.0, %v1119
  %v1121 = vmul.f32 %v1118, %v1120
  %v1122 = vadd.f32 %v1118, %v1121
  %vm1123 = vweird.f32 %v962
  %vm1124 = vweird.f32 %v1118
  %vm1125 = vmor %vm1123, %vm1124
  %v1126 = vsel %vm1125, %v1118, %v1122
  %v1127 = vand.u32 2147483647, %v962
  %vm1128 = vcmp.eq.f32.partialorder %v1127, 8.507059e+37
  %v1129 = vand.u32 %v962, 2147483648
  %v1130 = vor.u32 1.1754944e-38, %v1129
  %v1131 = vsel %vm1128, %v1130, %v1126
  %v1132 = vmul.f32 1.0, %v1131
  %v1133 = vrcp.pop %v963
  %v1134 = vmul.f32 %v963, %v1133
  %v1135 = vsub.f32 1.0, %v1134
  %v1136 = vmul.f32 %v1133, %v1135
  %v1137 = vadd.f32 %v1133, %v1136
  %vm1138 = vweird.f32 %v963
  %vm1139 = vweird.f32 %v1133
  %vm1140 = vmor %vm1138, %vm1139
  %v1141 = vsel %vm1140, %v1133, %v1137
  %v1142 = vand.u32 2147483647, %v963
  %vm1143 = vcmp.eq.f32.partialorder %v1142, 8.507059e+37
  %v1144 = vand.u32 %v963, 2147483648
  %v1145 = vor.u32 1.1754944e-38, %v1144
  %v1146 = vsel %vm1143, %v1145, %v1141
  %v1147 = vmul.f32 1.0, %v1146
  %v1148 = vrcp.pop %v964
  %v1149 = vmul.f32 %v964, %v1148
  %v1150 = vsub.f32 1.0, %v1149
  %v1151 = vmul.f32 %v1148, %v1150
  %v1152 = vadd.f32 %v1148, %v1151
  %vm1153 = vweird.f32 %v964
  %vm1154 = vweird.f32 %v1148
  %vm1155 = vmor %vm1153, %vm1154
  %v1156 = vsel %vm1155, %v1148, %v1152
  %v1157 = vand.u32 2147483647, %v964
  %vm1158 = vcmp.eq.f32.partialorder %v1157, 8.507059e+37
  %v1159 = vand.u32 %v964, 2147483648
  %v1160 = vor.u32 1.1754944e-38, %v1159
  %v1161 = vsel %vm1158, %v1160, %v1156
  %v1162 = vmul.f32 1.0, %v1161
  %v1163 = vrcp.pop %v965
  %v1164 = vmul.f32 %v965, %v1163
  %v1165 = vsub.f32 1.0, %v1164
  %v1166 = vmul.f32 %v1163, %v1165
  %v1167 = vadd.f32 %v1163, %v1166
  %vm1168 = vweird.f32 %v965
  %vm1169 = vweird.f32 %v1163
  %vm1170 = vmor %vm1168, %vm1169
  %v1171 = vsel %vm1170, %v1163, %v1167
  %v1172 = vand.u32 2147483647, %v965
  %vm1173 = vcmp.eq.f32.partialorder %v1172, 8.507059e+37
  %v1174 = vand.u32 %v965, 2147483648
  %v1175 = vor.u32 1.1754944e-38, %v1174
  %v1176 = vsel %vm1173, %v1175, %v1171
  %v1177 = vmul.f32 1.0, %v1176
  %v1178 = vrcp.pop %v966
  %v1179 = vmul.f32 %v966, %v1178
  %v1180 = vsub.f32 1.0, %v1179
  %v1181 = vmul.f32 %v1178, %v1180
  %v1182 = vadd.f32 %v1178, %v1181
  %vm1183 = vweird.f32 %v966
  %vm1184 = vweird.f32 %v1178
  %vm1185 = vmor %vm1183, %vm1184
  %v1186 = vsel %vm1185, %v1178, %v1182
  %v1187 = vand.u32 2147483647, %v966
  %vm1188 = vcmp.eq.f32.partialorder %v1187, 8.507059e+37
  %v1189 = vand.u32 %v966, 2147483648
  %v1190 = vor.u32 1.1754944e-38, %v1189
  %v1191 = vsel %vm1188, %v1190, %v1186
  %v1192 = vmul.f32 1.0, %v1191
  %v1193 = vrcp.pop %v967
  %v1194 = vmul.f32 %v967, %v1193
  %v1195 = vsub.f32 1.0, %v1194
  %v1196 = vmul.f32 %v1193, %v1195
  %v1197 = vadd.f32 %v1193, %v1196
  %vm1198 = vweird.f32 %v967
  %vm1199 = vweird.f32 %v1193
  %vm1200 = vmor %vm1198, %vm1199
  %v1201 = vsel %vm1200, %v1193, %v1197
  %v1202 = vand.u32 2147483647, %v967
  %vm1203 = vcmp.eq.f32.partialorder %v1202, 8.507059e+37
  %v1204 = vand.u32 %v967, 2147483648
  %v1205 = vor.u32 1.1754944e-38, %v1204
  %v1206 = vsel %vm1203, %v1205, %v1201
  %v1207 = vmul.f32 1.0, %v1206
  %v1208 = vpack.c.bf16 %v997, %v982
  %v1209 = vpack.c.bf16 %v1027, %v1012
  %v1210 = vpack.c.bf16 %v1057, %v1042
  %v1211 = vpack.c.bf16 %v1087, %v1072
  %v1212 = vpack.c.bf16 %v1117, %v1102
  %v1213 = vpack.c.bf16 %v1147, %v1132
  %v1214 = vpack.c.bf16 %v1177, %v1162
  %v1215 = vpack.c.bf16 %v1207, %v1192
  %v1216 = vld [vmem:[%s21] sm:$0x1]
  %v1217 = vld [vmem:[#allocation2] sm:$0x1]
  %1219 = vset.pattern.permute.xlu0 0
  %1220 = vperm.xlu0 %1219, %v1217
  %v1221 = vpop.permute.xlu0 %1220
  %v1223 = vperm.slane %v1221, 0
  %v1225 = vsel %vm296, %v1216, 0
  %v1228 = vsel %vm296, %v1208, 0
  %v1231 = vsel %vm296, %v1209, 0
  %v1234 = vsel %vm296, %v1210, 0
  %v1237 = vsel %vm296, %v1211, 0
  %v1240 = vsel %vm296, %v1212, 0
  %v1243 = vsel %vm296, %v1213, 0
  %v1246 = vsel %vm296, %v1214, 0
  %v1249 = vsel %vm296, %v1215, 0
  %1251 = vmatpush.bf16.xpose.msra.mxu0 %v1249
  %1252 = vmatpush.bf16.xpose.msra.mxu0 %v1246
  %1253 = vmatpush.bf16.xpose.msra.mxu0 %v1243
  %1254 = vmatpush.bf16.xpose.msra.mxu0 %v1240
  %1255 = vmatpush.bf16.xpose.msra.mxu0 %v1237
  %1256 = vmatpush.bf16.xpose.msra.mxu0 %v1234
  %1257 = vmatpush.bf16.xpose.msra.mxu0 %v1231
  %1258 = vmatpush.bf16.xpose.msra.mxu0 %v1228
  %1259 = vmatmul.bf16.gmra.mxu0 %v1225
  %v1260 = vpop.f32.mrf.mxu0
  %v1261 = vadd.f32 %v1223, %v1260
  %v1262 = vpop.f32.mrf.mxu0
  %1263 = vdwg.mxu0
  %1264 = vst [vmem:[%s23] sm:$0x1] %v1261
  // Predicated region
  $region94: #{model_forward.1} parent=0 // pred_check
    _
  $region95: #{model_forward.1} parent=0 // pred_check_branch
    %1266 = sbr.rel (0) target = $region97
  $region96: #{model_forward.1} parent=0 // pred_region
    _
  $region97: #{model_forward.1} parent=0 // pred_fallthru
    _
  // Predicated region
  $region98: #{model_forward.1} parent=0 // pred_check
    _
  $region99: #{model_forward.1} parent=0 // pred_check_branch
    %1268 = sbr.rel (0) target = $region101
  $region100: #{model_forward.1} parent=0 // pred_region
    _
  $region101: #{model_forward.1} parent=0 // pred_fallthru
    _

</llo_original>
